<compile_context>
chip_gen: v5e
topology: v5e:2x2
jax: 0.10.0
libtpu: 0.0.40
codegen_flags: <defaults>
</compile_context>

<pallas_src>
import math

import jax
import jax.numpy as jnp
from jax.experimental import pallas as pl
from jax.experimental.pallas import tpu as pltpu


def make_positional_encoding(d_model: int, max_seq_length: int,
                             dtype=jnp.float32) -> jnp.ndarray:
    """Fixed sinusoidal PE buffer, shape (1, max_seq_length, d_model).

    Built in the model dtype at init so the forward path never pays a cast.
    """
    # PyTorch reference also requires even d_model (the 1::2 cos assignment
    # would shape-mismatch otherwise).
    assert d_model % 2 == 0, "d_model must be even for sinusoidal PE"
    position = jnp.arange(max_seq_length, dtype=jnp.float32)[:, None]          # (S, 1)
    div_term = jnp.exp(
        jnp.arange(0, d_model, 2, dtype=jnp.float32) * -(math.log(10000.0) / d_model)
    )                                                                           # (D/2,)
    pe = jnp.zeros((max_seq_length, d_model), dtype=jnp.float32)
    pe = pe.at[:, 0::2].set(jnp.sin(position * div_term))
    pe = pe.at[:, 1::2].set(jnp.cos(position * div_term))
    return pe[None, :, :].astype(dtype)                                         # (1, S, D)


def _add_pe_kernel(x_ref, pe_ref, o_ref):
    # x_ref, pe_ref, o_ref: (TR, L) tiles — same shape, no broadcast, no cast.
    o_ref[...] = x_ref[...] + pe_ref[...]


def _sublane_multiple(itemsize: int) -> int:
    """Row granularity matching dtype sublane packing: 8 f32, 16 bf16, 32 int8."""
    return 8 * max(1, 4 // max(1, itemsize))


def _choose_row_tile(R: int, L: int, itemsize: int,
                     target_bytes: int = 4 * 1024 * 1024) -> int:
    """Row tile so one (TR, L) block is ~target_bytes, rounded to sublane packing."""
    rows = max(1, target_bytes // max(1, L * itemsize))
    if rows >= R:
        return R
    sub = _sublane_multiple(itemsize)
    rows = max(sub, (rows // sub) * sub)
    return min(rows, R)


def _choose_lane_layout(s: int, d: int):
    """Lane-dense (R, L, pad) factorization of the per-batch s*d elements."""
    if d % 128 == 0:
        return s, d, 0                       # natural layout is already lane-dense
    n = s * d
    L = 128
    for cand in (2048, 1024, 512, 256, 128):
        if n % cand == 0:
            L = cand
            break
    R = pl.cdiv(n, L)
    pad = R * L - n                          # only the flattened tail is padded (<1%)
    return R, L, pad


def _run_add_pe(x3: jnp.ndarray, pe2: jnp.ndarray, TR: int) -> jnp.ndarray:
    """x3: (b, R, L), pe2: (>=num_tiles*TR-ish rows, L). Returns x3 + pe2 rows."""
    b, R, L = x3.shape
    grid = (pl.cdiv(R, TR), b)               # row tiles leading, batch innermost
    return pl.pallas_call(
        _add_pe_kernel,
        out_shape=jax.ShapeDtypeStruct((b, R, L), x3.dtype),
        grid_spec=pltpu.PrefetchScalarGridSpec(
            num_scalar_prefetch=0,
            grid=grid,
            in_specs=[
                # x: batch dim squeezed -> kernel sees (TR, L)
                pl.BlockSpec((None, TR, L), lambda j, i: (i, j, 0)),
                # pe: block index constant across the inner batch loop
                # -> Pallas skips re-DMA; PE streamed from HBM once total.
                pl.BlockSpec((TR, L), lambda j, i: (j, 0)),
            ],
            out_specs=pl.BlockSpec((None, TR, L), lambda j, i: (i, j, 0)),
        ),
        compiler_params=pltpu.CompilerParams(
            dimension_semantics=("parallel", "parallel"),
            vmem_limit_bytes=32 * 1024 * 1024,
        ),
        # Pure in-place add: donate x's buffer to the output.
        input_output_aliases={0: 0},
    )(x3, pe2)


def positional_encoding_forward(x: jnp.ndarray, pe: jnp.ndarray) -> jnp.ndarray:
    """x: (batch, seq, d_model); pe: (1, max_seq_length, d_model) -> x + pe[:, :seq].

    NOTE: x is donated to the output (input_output_aliases) — donate x at the
    jit boundary (donate_argnums) and do not reuse it after this call.
    """
    assert x.ndim == 3, "expected (batch, seq, d_model)"
    b, s, d = x.shape
    assert pe.ndim == 3 and pe.shape[0] == 1 and pe.shape[2] == d, "bad pe shape"
    assert s <= pe.shape[1], "seq_length exceeds max_seq_length of the PE table"

    if pe.dtype != x.dtype:
        # Hoist in production: build pe with make_positional_encoding(dtype=x.dtype).
        pe = pe.astype(x.dtype)

    itemsize = jnp.dtype(x.dtype).itemsize

    if d % 128 == 0:
        # Natural layout is lane-dense: no per-call slice/reshape of x or pe.
        # The full (max_seq, d) pe buffer is passed; the grid only touches the
        # first cdiv(s, TR) row tiles, and tail-block extra rows only feed
        # output rows that are masked out on writeback.
        TR = _choose_row_tile(s, d, itemsize)
        return _run_add_pe(x, pe[0], TR)

    # d not a multiple of 128: flatten the per-batch slab to a lane-dense (R, L)
    # view (padding only the flattened tail if required) so stores stay full-width.
    R, L, pad = _choose_lane_layout(s, d)
    n = s * d
    pe_flat = pe[0, :s, :].reshape(n)
    x_flat = x.reshape(b, n)
    if pad:
        pe_flat = jnp.pad(pe_flat, (0, pad))
        x_flat = jnp.pad(x_flat, ((0, 0), (0, pad)))
    pe2 = pe_flat.reshape(R, L)
    x3 = x_flat.reshape(b, R, L)

    TR = _choose_row_tile(R, L, itemsize)
    out = _run_add_pe(x3, pe2, TR)

    out = out.reshape(b, R * L)
    if pad:
        out = out[:, :n]
    return out.reshape(b, s, d)


if __name__ == "__main__":
    batch, seq, d_model = 2, 8, 32
    max_seq_length = 16

    key = jax.random.PRNGKey(0)
    x = jax.random.normal(key, (batch, seq, d_model), dtype=jnp.float32)

    # Cast hoisted to init (register_buffer-style).
    pe = make_positional_encoding(d_model, max_seq_length, dtype=x.dtype)

    # Compute the reference BEFORE the kernel call (x is donated to the output).
    ref = jax.block_until_ready(x + pe[:, :seq])

    # Donate x at the jit boundary so the in-place aliasing is honored end-to-end.
    fwd = jax.jit(positional_encoding_forward, donate_argnums=(0,))
    out = jax.block_until_ready(fwd(x, pe))

    assert out.shape == (batch, seq, d_model)
    assert out.dtype == ref.dtype
    assert jnp.allclose(out, ref, atol=1e-6), "mismatch vs reference"

    print("KERNEL_OK")
</pallas_src>

<mosaic_0001>
module attributes {stable_mosaic.version = 11 : i64} {
  func.func @_add_pe_kernel(%arg0: i32, %arg1: i32, %arg2: memref<1x1x256xf32, #tpu.memory_space<vmem>>, %arg3: memref<1x256xf32, #tpu.memory_space<vmem>>, %arg4: memref<1x1x256xf32, #tpu.memory_space<vmem>>) attributes {dimension_semantics = [#tpu.dimension_semantics<parallel>, #tpu.dimension_semantics<parallel>], iteration_bounds = array<i64: 1, 2>, scalar_prefetch = 0 : i64, scratch_operands = 0 : i64, tpu.core_type = #tpu.core_type<tc>, window_params = [{transform_indices = @transform_0, window_bounds = array<i64: 1, 1, 256>}, {transform_indices = @transform_1, window_bounds = array<i64: 1, 256>}, {transform_indices = @transform_2, window_bounds = array<i64: 1, 1, 256>}]} {
    %c0 = arith.constant 0 : index
    %c0_0 = arith.constant 0 : index
    %c0_1 = arith.constant 0 : index
    %0 = vector.load %arg2[%c0, %c0_0, %c0_1] : memref<1x1x256xf32, #tpu.memory_space<vmem>>, vector<1x1x256xf32>
    %1 = vector.shape_cast %0 : vector<1x1x256xf32> to vector<1x256xf32>
    %c0_2 = arith.constant 0 : index
    %c0_3 = arith.constant 0 : index
    %2 = vector.load %arg3[%c0_2, %c0_3] : memref<1x256xf32, #tpu.memory_space<vmem>>, vector<1x256xf32>
    %3 = arith.addf %1, %2 : vector<1x256xf32>
    %c0_4 = arith.constant 0 : index
    %c0_5 = arith.constant 0 : index
    %c0_6 = arith.constant 0 : index
    %4 = vector.load %arg4[%c0_4, %c0_5, %c0_6] : memref<1x1x256xf32, #tpu.memory_space<vmem>>, vector<1x1x256xf32>
    %5 = vector.shape_cast %4 : vector<1x1x256xf32> to vector<1x256xf32>
    %6 = vector.shape_cast %3 : vector<1x256xf32> to vector<1x1x256xf32>
    tpu.vector_store %arg4[%c0_4, %c0_5, %c0_6], %6 {strides = array<i32>} : memref<1x1x256xf32, #tpu.memory_space<vmem>>, vector<1x1x256xf32>,
    return
  }
  func.func @transform_0(%arg0: i32, %arg1: i32) -> (i32, i32, i32) {
    %c0_i32 = arith.constant 0 : i32
    %c0_i32_0 = arith.constant 0 : i32
    return %arg1, %arg0, %c0_i32 : i32, i32, i32
  }
  func.func @transform_1(%arg0: i32, %arg1: i32) -> (i32, i32) {
    %c0_i32 = arith.constant 0 : i32
    %c0_i32_0 = arith.constant 0 : i32
    return %arg0, %c0_i32 : i32, i32
  }
  func.func @transform_2(%arg0: i32, %arg1: i32) -> (i32, i32, i32) {
    %c0_i32 = arith.constant 0 : i32
    %c0_i32_0 = arith.constant 0 : i32
    return %arg1, %arg0, %c0_i32 : i32, i32, i32
  }
}

</mosaic_0001>

<llo_original>
// kernel: squeeze.1
$region0: #{squeeze.1}
  %s0 = inlined_call_operand.vmem [shape: f32[1,8,32], index: 0, kind: input, shape index: {}]
  %s1 = inlined_call_operand.vmem [shape: f32[1,256], index: 1, kind: output, shape index: {}]
  $region1: #{squeeze.1} parent=0
    #allocation0 [shape = 'u8[8192]{0}', space=vmem, size = 0x2000, scoped, tag = 'scoped mem for output reshape']
    %s2 = smov 3
    %v3 = vld [vmem:[%s0] ss:$4 sm:%s2]
    %vm4 = vcmask 261120
    %5 = vst.msk [vmem:[#allocation0] ss:$8 sm:$0x3] %vm4, %v3
    %s6 = scalar_lea.vmem %s0, 3
    %s7 = smov 3
    %v8 = vld [vmem:[%s6] ss:$4 sm:%s7]
    %9 = vrot.lane.b32.xlu0 %v8, 96
    %v10 = vpop.permute.xlu0 %9
    %vm11 = vcmask 1048320
    %12 = vst.msk [vmem:[#allocation0] ss:$8 sm:$0x3] %vm11, %v10
    %s13 = scalar_lea.vmem %s0, 2
    %s14 = smov 3
    %v15 = vld [vmem:[%s13] ss:$4 sm:%s14]
    %16 = vrot.lane.b32.xlu0 %v15, 64
    %v17 = vpop.permute.xlu0 %16
    %vm18 = vcmask 785920
    %19 = vst.msk [vmem:[#allocation0] ss:$8 sm:$0x3] %vm18, %v17
    %s20 = scalar_lea.vmem %s0, 1
    %s21 = smov 3
    %v22 = vld [vmem:[%s20] ss:$4 sm:%s21]
    %23 = vrot.lane.b32.xlu0 %v22, 32
    %v24 = vpop.permute.xlu0 %23
    %vm25 = vcmask 523520
    %26 = vst.msk [vmem:[#allocation0] ss:$8 sm:$0x3] %vm25, %v24
    %s28 = ssub.s32 2, 1
    %v29 = vld [vmem:[#allocation0] sm:%s28]
    %s31 = ssub.s32 2, 1
    %32 = vst [vmem:[%s1] sm:%s31] %v29
    %s33 = scalar_lea.vmem [#allocation0], 8
    %v34 = vld [vmem:[%s33] sm:%s28]
    %s36 = ssub.s32 2, 1
    %s37 = scalar_lea.vmem %s1, 1
    %38 = vst [vmem:[%s37] sm:%s36] %v34

// kernel: positional_encoding_forward.1
$region0: #{positional_encoding_forward.1}
  #allocation0 [shape = 'u32[]', space=smem, size = 0x4, offset = 0x4, fixed_abs, tag = 'smem constant byte address 0x4 - core index']
  #allocation1 [shape = 'u32[72,128]{1,0:T(1,128)}', space=vmem, size = 0x9000, scoped, tag = 'internal scratch']
  %s0 = inlined_call_operand.vmem [shape: f32[2,1,256], index: 0, kind: input, shape index: {}, may-alias: {0,2}]
  %s1 = inlined_call_operand.vmem [shape: f32[1,256], index: 1, kind: input, shape index: {}]
  %s2 = inlined_call_operand.vmem [shape: f32[2,1,256], index: 2, kind: output, shape index: {}, may-alias: {0,2}]
  %s3 = sld [smem:[#allocation0]]
  $region41: #{positional_encoding_forward.1} parent=0
    _
  %s5 = ssub.s32 1, %s3
  %s6 = scalar_select 0, %s5, %s3
  loop: start=0, step=1, limit=4
  $region2: #{positional_encoding_forward.1} parent=0 // loop_pre_header
    _
  $region3: #{positional_encoding_forward.1} parent=0 // loop_header
    %s8 = sphi 0, %s12
    %p9 = scmp.ge.s32.totalorder %s8, 4
    %s15 = sphi 0, %s27
    %s16 = sphi 0, %s23
    %s17 = sphi 0, %s15
    %s18 = sphi 0, %s16
    %s19 = sphi 0, %s17
    %s20 = sphi 0, %s18
    %s32 = sphi 0, %s34
    %s35 = sphi 0, %s32
    %s36 = sphi 0, %s35
    %s52 = sphi 0, %s36
    %s58 = sphi 0, %s60
    %s61 = sphi 0, %s58
    %s62 = sphi 0, %s61
    %s78 = sphi 0, %s62
    %s86 = sphi 0, %s88
    %s89 = sphi 0, %s86
    %s90 = sphi 0, %s89
    %s106 = sphi 0, %s90
  $region4: #{positional_encoding_forward.1} parent=0 // loop_header_branch
    %11 = sbr.rel (%p9) target = $region8
  $region5: #{positional_encoding_forward.1} parent=0 // loop_body
    %s13 = ssub.s32 %s8, 1
    %s14 = ssub.s32 %s8, 2
    %s21 = sadd.s32 1, %s16
    %p22 = scmp.ge.s32.totalorder %s21, 2
    %s23 = scalar_select %p22, 0, %s21
    %s24 = sadd.s32 1, %s15
    %s25 = scalar_select %p22, %s24, %s15
    %p26 = scmp.ge.s32.totalorder %s25, 1
    %s27 = scalar_select %p26, 0, %s25
    %s28 = ssub.s32 %s16, %s23
    %s29 = ssub.s32 %s15, %s27
    %s30 = sor.u32 %s28, %s29
    %p31 = scmp.eq.s32.totalorder %s30, 0
    %s33 = sadd.s32 %s32, 1
    %s34 = scalar_select %p31, %s32, %s33
    %p37 = pneg %p31
    %p38 = scmp.eq.s32.totalorder %s8, 1
    %p39 = por %p37, %p38
    %p40 = scmp.ne.s32.totalorder %s32, %s35
    %p41 = scmp.eq.s32.totalorder %s8, 0
    %p42 = por %p40, %p41
    %p43 = scmp.ne.s32.totalorder %s32, %s35
    %p44 = scmp.eq.s32.totalorder %s13, 1
    %p45 = por %p43, %p44
    %p46 = scmp.ne.s32.totalorder %s35, %s36
    %p47 = scmp.eq.s32.totalorder %s13, 0
    %p48 = por %p46, %p47
    %p49 = scmp.ne.s32.totalorder %s35, %s36
    %p50 = scmp.eq.s32.totalorder %s14, 1
    %p51 = por %p49, %p50
    %p53 = scmp.ne.s32.totalorder %s36, %s52
    %p54 = scmp.eq.s32.totalorder %s14, 0
    %p55 = por %p53, %p54
    %s56 = ssub.s32 %s15, %s27
    %p57 = scmp.eq.s32.totalorder %s56, 0
    %s59 = sadd.s32 %s58, 1
    %s60 = scalar_select %p57, %s58, %s59
    %p63 = pneg %p57
    %p64 = scmp.eq.s32.totalorder %s8, 1
    %p65 = por %p63, %p64
    %p66 = scmp.ne.s32.totalorder %s58, %s61
    %p67 = scmp.eq.s32.totalorder %s8, 0
    %p68 = por %p66, %p67
    %p69 = scmp.ne.s32.totalorder %s58, %s61
    %p70 = scmp.eq.s32.totalorder %s13, 1
    %p71 = por %p69, %p70
    %p72 = scmp.ne.s32.totalorder %s61, %s62
    %p73 = scmp.eq.s32.totalorder %s13, 0
    %p74 = por %p72, %p73
    %p75 = scmp.ne.s32.totalorder %s61, %s62
    %p76 = scmp.eq.s32.totalorder %s14, 1
    %p77 = por %p75, %p76
    %p79 = scmp.ne.s32.totalorder %s62, %s78
    %p80 = scmp.eq.s32.totalorder %s14, 0
    %p81 = por %p79, %p80
    %s82 = ssub.s32 %s16, %s23
    %s83 = ssub.s32 %s15, %s27
    %s84 = sor.u32 %s82, %s83
    %p85 = scmp.eq.s32.totalorder %s84, 0
    %s87 = sadd.s32 %s86, 1
    %s88 = scalar_select %p85, %s86, %s87
    %p91 = pneg %p85
    %p92 = scmp.eq.s32.totalorder %s8, 1
    %p93 = por %p91, %p92
    %p94 = scmp.ne.s32.totalorder %s86, %s89
    %p95 = scmp.eq.s32.totalorder %s8, 0
    %p96 = por %p94, %p95
    %p97 = scmp.ne.s32.totalorder %s86, %s89
    %p98 = scmp.eq.s32.totalorder %s13, 1
    %p99 = por %p97, %p98
    %p100 = scmp.ne.s32.totalorder %s89, %s90
    %p101 = scmp.eq.s32.totalorder %s13, 0
    %p102 = por %p100, %p101
    %p103 = scmp.ne.s32.totalorder %s89, %s90
    %p104 = scmp.eq.s32.totalorder %s14, 1
    %p105 = por %p103, %p104
    %p107 = scmp.ne.s32.totalorder %s90, %s106
    %p108 = scmp.eq.s32.totalorder %s14, 0
    %p109 = por %p107, %p108
    %p110 = scmp.le.s32.totalorder 1, %s8
    %p111 = scmp.lt.s32.totalorder %s8, 3
    %p112 = pnand %p110, %p111
    %p113 = pneg %p112
    // Predicated region
    $region9: #{positional_encoding_forward.1} parent=5 // pred_check
      _
    $region10: #{positional_encoding_forward.1} parent=5 // pred_check_branch
      %115 = sbr.rel (%p112) target = $region12
    $region11: #{positional_encoding_forward.1} parent=5 // pred_region
      %s116 = ssub.s32 %s8, 1
      // Predicated region
      $region13: #{positional_encoding_forward.1} parent=11 // pred_check
        %p117 = pneg %p74
      $region14: #{positional_encoding_forward.1} parent=11 // pred_check_branch
        %119 = sbr.rel (%p117) target = $region16
      $region15: #{positional_encoding_forward.1} parent=11 // pred_region
        %p120 = scmp.lt.s32.totalorder %s17, 0
        %s121 = scalar_select %p120, %s17, 0
        %s122 = smul.addr %s121, 2
        %s123 = scalar_lea.vmem %s1, %s122
      $region16: #{positional_encoding_forward.1} parent=11 // pred_fallthru
        _
    $region12: #{positional_encoding_forward.1} parent=5 // pred_fallthru
      _
    %p124 = scmp.lt.s32.totalorder %s8, 2
    // Predicated region
    $region17: #{positional_encoding_forward.1} parent=5 // pred_check
      %p125 = pneg %p124
    $region18: #{positional_encoding_forward.1} parent=5 // pred_check_branch
      %127 = sbr.rel (%p125) target = $region20
    $region19: #{positional_encoding_forward.1} parent=5 // pred_region
      // Predicated region
      $region21: #{positional_encoding_forward.1} parent=19 // pred_check
        %p128 = pneg %p42
      $region22: #{positional_encoding_forward.1} parent=19 // pred_check_branch
        %130 = sbr.rel (%p128) target = $region24
      $region23: #{positional_encoding_forward.1} parent=19 // pred_region
        %p131 = scmp.lt.s32.totalorder %s16, 1
        %s132 = scalar_select %p131, %s16, 1
        %p133 = scmp.lt.s32.totalorder %s15, 0
        %s134 = scalar_select %p133, %s15, 0
        %s135 = smul.addr %s134, 2
        %s136 = smul.addr %s132, 2
        %s137 = sadd.s32 %s135, %s136
        %s138 = scalar_lea.vmem %s0, %s137
      $region24: #{positional_encoding_forward.1} parent=19 // pred_fallthru
        _
    $region20: #{positional_encoding_forward.1} parent=5 // pred_fallthru
      _
    %p139 = scmp.le.s32.totalorder 1, %s8
    %p140 = scmp.lt.s32.totalorder %s8, 3
    %p141 = pnand %p139, %p140
    %p142 = pneg %p141
    // Predicated region
    $region25: #{positional_encoding_forward.1} parent=5 // pred_check
      _
    $region26: #{positional_encoding_forward.1} parent=5 // pred_check_branch
      %144 = sbr.rel (%p141) target = $region28
    $region27: #{positional_encoding_forward.1} parent=5 // pred_region
      %s145 = ssub.s32 %s8, 1
      %p146 = scmp.lt.s32.totalorder %s18, 1
      %s147 = scalar_select %p146, %s18, 1
      %p148 = scmp.lt.s32.totalorder %s17, 0
      %s149 = scalar_select %p148, %s17, 0
      %s150 = smul.addr %s149, 2
      %s151 = smul.addr %s147, 2
      %s152 = sadd.s32 %s150, %s151
      %s153 = scalar_lea.vmem %s0, %s152
      %p154 = pneg %p48
      %p155 = pneg %p45
      %p156 = scmp.lt.s32.totalorder %s17, 0
      %s157 = scalar_select %p156, %s17, 0
      %s158 = smul.addr %s157, 2
      %s159 = scalar_lea.vmem %s1, %s158
      %p160 = pneg %p74
      %p161 = pneg %p71
      %p162 = pneg %p102
      %p163 = pneg %p99
      %p164 = scmp.lt.s32.totalorder %s18, 1
      %s165 = scalar_select %p164, %s18, 1
      %p166 = scmp.lt.s32.totalorder %s17, 0
      %s167 = scalar_select %p166, %s17, 0
      %s168 = smul.addr %s167, 2
      %s169 = smul.addr %s165, 2
      %s170 = sadd.s32 %s168, %s169
      %s171 = scalar_lea.vmem %s2, %s170
      %p172 = scmp.lt.s32.totalorder %s18, 1
      %s173 = scalar_select %p172, %s18, 1
      %p174 = scmp.lt.s32.totalorder %s17, 0
      %s175 = scalar_select %p174, %s17, 0
      %s176 = smul.addr %s175, 2
      %s177 = smul.addr %s173, 2
      %s178 = sadd.s32 %s176, %s177
      %s179 = scalar_lea.vmem %s0, %s178
      %p180 = scmp.lt.s32.totalorder %s17, 0
      %s181 = scalar_select %p180, %s17, 0
      %s182 = smul.addr %s181, 2
      %s183 = scalar_lea.vmem %s1, %s182
      %p184 = scmp.lt.s32.totalorder %s18, 1
      %s185 = scalar_select %p184, %s18, 1
      %p186 = scmp.lt.s32.totalorder %s17, 0
      %s187 = scalar_select %p186, %s17, 0
      %s188 = smul.addr %s187, 2
      %s189 = smul.addr %s185, 2
      %s190 = sadd.s32 %s188, %s189
      %s191 = scalar_lea.vmem %s2, %s190
      %v192 = vld [vmem:[%s179] sm:$0x3]
      %v193 = vld [vmem:[%s183] sm:$0x3]
      %v194 = vadd.f32 %v192, %v193
      %v195 = vlaneseq
      %vm196 = vcmp.ge.s32.totalorder %v195, 0
      %vm197 = vcmp.lt.s32.totalorder %v195, 256
      %vm198 = vmand %vm196, %vm197
      %199 = vst.msk [vmem:[%s191] sm:$0x3] %vm198, %v194
      %p200 = scmp.lt.s32.totalorder %s18, 1
      %s201 = scalar_select %p200, %s18, 1
      %p202 = scmp.lt.s32.totalorder %s17, 0
      %s203 = scalar_select %p202, %s17, 0
      %s204 = smul.addr %s203, 2
      %s205 = smul.addr %s201, 2
      %s206 = sadd.s32 %s204, %s205
      %s207 = scalar_lea.vmem %s2, %s206
      // Predicated region
      $region29: #{positional_encoding_forward.1} parent=27 // pred_check
        %p208 = pneg %p99
      $region30: #{positional_encoding_forward.1} parent=27 // pred_check_branch
        %210 = sbr.rel (%p208) target = $region32
      $region31: #{positional_encoding_forward.1} parent=27 // pred_region
        _
      $region32: #{positional_encoding_forward.1} parent=27 // pred_fallthru
        _
    $region28: #{positional_encoding_forward.1} parent=5 // pred_fallthru
      _
    %p211 = scmp.le.s32.totalorder 2, %s8
    // Predicated region
    $region33: #{positional_encoding_forward.1} parent=5 // pred_check
      %p212 = pneg %p211
    $region34: #{positional_encoding_forward.1} parent=5 // pred_check_branch
      %214 = sbr.rel (%p212) target = $region36
    $region35: #{positional_encoding_forward.1} parent=5 // pred_region
      %s215 = ssub.s32 %s8, 2
      // Predicated region
      $region37: #{positional_encoding_forward.1} parent=35 // pred_check
        %p216 = pneg %p105
      $region38: #{positional_encoding_forward.1} parent=35 // pred_check_branch
        %218 = sbr.rel (%p216) target = $region40
      $region39: #{positional_encoding_forward.1} parent=35 // pred_region
        %p219 = scmp.lt.s32.totalorder %s20, 1
        %s220 = scalar_select %p219, %s20, 1
        %p221 = scmp.lt.s32.totalorder %s19, 0
        %s222 = scalar_select %p221, %s19, 0
        %s223 = smul.addr %s222, 2
        %s224 = smul.addr %s220, 2
        %s225 = sadd.s32 %s223, %s224
        %s226 = scalar_lea.vmem %s2, %s225
      $region40: #{positional_encoding_forward.1} parent=35 // pred_fallthru
        _
    $region36: #{positional_encoding_forward.1} parent=5 // pred_fallthru
      _
  $region6: #{positional_encoding_forward.1} parent=0 // loop_footer
    %s12 = sadd.s32 1, %s8
  $region7: #{positional_encoding_forward.1} parent=0 // loop_footer_branch
    %7 = sbr.rel target = $region3
  $region8: #{positional_encoding_forward.1} parent=0 // loop_exit
    _

</llo_original>
